<compile_context>
chip_gen: v5e
topology: v5e:2x2
jax: 0.10.0
libtpu: 0.0.40
codegen_flags: <defaults>
</compile_context>

<pallas_src>
import functools

import numpy as np
import jax
import jax.numpy as jnp
from jax import lax
from jax.experimental import pallas as pl
from jax.experimental.pallas import tpu as pltpu


# --------------------------------------------------------------------------- #
# Generation-aware VMEM / tile-size policy.
# --------------------------------------------------------------------------- #

def _vmem_policy():
    """Returns (vmem_limit_bytes, target_block_bytes) for this TPU generation."""
    cap = None
    try:
        cap = int(pltpu.get_tpu_info().vmem_capacity_bytes)
    except Exception:
        cap = None
    if cap is None or cap <= 80 * 1024 * 1024:
        # v7x-class (64 MiB per TensorCore) or unknown: stay conservative.
        return 44 * 1024 * 1024, 2 * 1024 * 1024
    # v5e / v6e class (128 MiB VMEM): bigger tiles, fewer grid steps.
    return 96 * 1024 * 1024, 4 * 1024 * 1024


def _largest_divisor_leq(n, cap, multiple):
    """Largest d <= cap with d % multiple == 0 and n % d == 0, else None."""
    cap = min(cap, n)
    d = (cap // multiple) * multiple
    while d >= multiple:
        if n % d == 0:
            return int(d)
        d -= multiple
    return None


def _pick_tiles(B, S, H, D, itemsize, target_bytes, vmem_limit_bytes):
    """Pick (batch_tile, seq_tile); both exact divisors, seq_tile a multiple of 8
    (or the full S).  Targets ~target_bytes per x block, guarantees >=2 grid
    blocks when possible (v7x has 2 TensorCores), and respects a VMEM budget
    accounting for double-buffered blocks + whole-block f32 intermediates."""
    row_bytes = H * D * itemsize

    want_rows = max(8, target_bytes // max(1, row_bytes))
    if S <= want_rows:
        seq_tile = S
    else:
        st = _largest_divisor_leq(S, want_rows, 8)
        seq_tile = st if st is not None else S

    b_tile = 1
    if seq_tile == S and S * row_bytes < target_bytes and B > 1:
        cap = max(1, target_bytes // max(1, S * row_bytes))
        b_tile = _largest_divisor_leq(B, cap, 1) or 1

    def n_blocks(bt, st):
        return (B // bt) * (S // st)

    # Make sure both v7x TensorCores get at least one block.
    if n_blocks(b_tile, seq_tile) < 2:
        if b_tile > 1:
            b_tile = _largest_divisor_leq(B, max(1, b_tile // 2), 1) or 1
        if n_blocks(b_tile, seq_tile) < 2:
            st = _largest_divisor_leq(S, max(8, seq_tile // 2), 8)
            if st is not None and st < seq_tile:
                seq_tile = st

    # VMEM budget: 2 pipeline buffers x (4 x blocks + 2 table blocks) plus
    # ~5 whole-block f32 intermediates (x f32, x_rot, tiled tables, result).
    budget = int(0.8 * vmem_limit_bytes)

    def est(bt, st):
        x_blk = bt * st * row_bytes
        tbl_blk = st * D * 4
        temps = 5 * bt * st * H * D * 4
        return 2 * (4 * x_blk + 2 * tbl_blk) + temps

    while est(b_tile, seq_tile) > budget:
        if b_tile > 1:
            nb = _largest_divisor_leq(B, max(1, b_tile // 2), 1) or 1
            if nb < b_tile:
                b_tile = nb
                continue
        st = _largest_divisor_leq(S, max(8, seq_tile // 2), 8)
        if st is not None and st < seq_tile:
            seq_tile = st
            continue
        break  # cannot shrink further; leave the rest to the compiler

    return b_tile, seq_tile


# ------------------------------ Pallas kernels ----------------------------- #

def _rope_kernel_heads_minor(cos_ref, sin_ref, xq_ref, xk_ref, oq_ref, ok_ref,
                             *, half, compute_dtype):
    """Blocks: cos/sin (tS, D); x/o (bT, tS, H, D).
    Used when D % 128 == 0 and H % 8 == 0 (already lane- and sublane-dense)."""
    cos = cos_ref[...].astype(compute_dtype)[None, :, None, :]
    sin = sin_ref[...].astype(compute_dtype)[None, :, None, :]
    for x_ref, o_ref in ((xq_ref, oq_ref), (xk_ref, ok_ref)):
        x = x_ref[...].astype(compute_dtype)
        # swap-halves rotation along head_dim (lane dim); static slices + concat
        x_rot = jnp.concatenate([x[..., half:], x[..., :half]], axis=-1)
        o_ref[...] = (x * cos + x_rot * sin).astype(o_ref.dtype)


def _rope_kernel_folded(cos_ref, sin_ref, xq_ref, xk_ref, oq_ref, ok_ref,
                        *, n_heads, head_dim, compute_dtype):
    """Blocks: cos/sin (tS, D); x/o (bT, tS, H*D) with heads folded into lanes.
    Keeps loads/stores lane-dense whenever H*D % 128 == 0 (covers head_dim<128
    and few-head / GQA tensors) and keeps the >=8-sized seq dim in sublanes."""
    half = head_dim // 2
    cos = cos_ref[...].astype(compute_dtype)                 # (tS, D)
    sin = sin_ref[...].astype(compute_dtype)
    # Tile the per-position tables across heads inside the kernel (avoids
    # shipping an H-times-larger table through HBM); hidden under the DMAs.
    cos_t = jnp.concatenate([cos] * n_heads, axis=-1)[None]  # (1, tS, H*D)
    sin_t = jnp.concatenate([sin] * n_heads, axis=-1)[None]
    for x_ref, o_ref in ((xq_ref, oq_ref), (xk_ref, ok_ref)):
        x = x_ref[...].astype(compute_dtype)                 # (bT, tS, H*D)
        parts = []
        for h in range(n_heads):
            lo = h * head_dim
            parts.append(x[..., lo + half:lo + head_dim])    # second half
            parts.append(x[..., lo:lo + half])               # first half
        x_rot = jnp.concatenate(parts, axis=-1)              # per-head half swap
        o_ref[...] = (x * cos_t + x_rot * sin_t).astype(o_ref.dtype)


# --------------------------------- wrapper --------------------------------- #

def rope_pallas(xq, xk, cos_full, sin_signed, *, compute_dtype=jnp.float32,
                batch_tile=None, seq_tile=None):
    B, S, H, D = xq.shape
    assert xk.shape == (B, S, H, D)
    assert D % 2 == 0
    assert cos_full.shape == (S, D) and sin_signed.shape == (S, D)
    half = D // 2

    vmem_limit, target_bytes = _vmem_policy()
    bt, st = _pick_tiles(B, S, H, D, xq.dtype.itemsize, target_bytes, vmem_limit)
    if batch_tile is not None:
        bt = batch_tile
    if seq_tile is not None:
        st = seq_tile
    assert B % bt == 0 and S % st == 0
    if st != S:
        assert st % 8 == 0, "seq tile must be a multiple of 8 (or equal S)"

    # seq outer, batch INNER: the (st, D) table block index is constant along
    # the inner grid axis, so the table stays VMEM-resident across batch steps.
    grid = (S // st, B // bt)
    f_spec = pl.BlockSpec((st, D), lambda i, j: (i, 0))

    bytes_accessed = (2 * xq.size * xq.dtype.itemsize
                      + 2 * xk.size * xk.dtype.itemsize
                      + cos_full.size * cos_full.dtype.itemsize
                      + sin_signed.size * sin_signed.dtype.itemsize)
    cost = pl.CostEstimate(flops=3 * (xq.size + xk.size), transcendentals=0,
                           bytes_accessed=int(bytes_accessed))
    cparams = pltpu.CompilerParams(
        dimension_semantics=("parallel", "parallel"),
        vmem_limit_bytes=vmem_limit)

    heads_minor = (D % 128 == 0) and (H % 8 == 0)

    if heads_minor:
        kernel = functools.partial(_rope_kernel_heads_minor, half=half,
                                   compute_dtype=compute_dtype)
        x_spec = pl.BlockSpec((bt, st, H, D), lambda i, j: (j, i, 0, 0))
        oq, ok = pl.pallas_call(
            kernel, grid=grid,
            in_specs=[f_spec, f_spec, x_spec, x_spec],
            out_specs=[x_spec, x_spec],
            out_shape=[jax.ShapeDtypeStruct(xq.shape, xq.dtype),
                       jax.ShapeDtypeStruct(xk.shape, xk.dtype)],
            compiler_params=cparams, cost_estimate=cost,
        )(cos_full, sin_signed, xq, xk)
        return oq, ok

    # Folded path: view (B, S, H, D) as (B, S, H*D) (free for contiguous data)
    # so the block's last two dims are (seq_tile, H*D): sublane-full and
    # lane-dense whenever H*D % 128 == 0.
    F = H * D
    kernel = functools.partial(_rope_kernel_folded, n_heads=H, head_dim=D,
                               compute_dtype=compute_dtype)
    x_spec = pl.BlockSpec((bt, st, F), lambda i, j: (j, i, 0))
    oq, ok = pl.pallas_call(
        kernel, grid=grid,
        in_specs=[f_spec, f_spec, x_spec, x_spec],
        out_specs=[x_spec, x_spec],
        out_shape=[jax.ShapeDtypeStruct((B, S, F), xq.dtype),
                   jax.ShapeDtypeStruct((B, S, F), xk.dtype)],
        compiler_params=cparams, cost_estimate=cost,
    )(cos_full, sin_signed, xq.reshape(B, S, F), xk.reshape(B, S, F))
    return oq.reshape(B, S, H, D), ok.reshape(B, S, H, D)


# --------------------------- module-level glue ----------------------------- #

def precompute_rope_tables(dim, end, theta=10000.0):
    """JAX equivalent of precompute_freqs_cis, stored as sign-folded full-width
    (cos_full, sin_signed) tables of shape (end, dim)."""
    freqs = 1.0 / (theta ** (jnp.arange(0, dim, 2)[: dim // 2].astype(jnp.float32) / dim))
    t = jnp.arange(end, dtype=jnp.float32)
    angles = jnp.outer(t, freqs).astype(jnp.float32)            # (end, dim//2)
    cos, sin = jnp.cos(angles), jnp.sin(angles)
    cos_full = jnp.concatenate([cos, cos], axis=-1)             # (end, dim)
    sin_signed = jnp.concatenate([-sin, sin], axis=-1)          # (end, dim)
    return cos_full, sin_signed


class RoPE:
    """JAX/Pallas port of the PyTorch RoPE module (forward only)."""

    def __init__(self, head_dim, max_seq_len, rope_theta=10000.0):
        self.head_dim = head_dim
        # deterministic, data-free "parameter" (requires_grad=False in torch)
        self.cos_full, self.sin_signed = precompute_rope_tables(
            head_dim, max_seq_len, rope_theta)

    def __call__(self, xq, xk, start_pos, seqlen, partial=False):
        if partial:
            # Matches the reference: only the first head_dim features are rotated
            # and only those are returned (the trailing cat in torch is dead code
            # because xq_out/xk_out are built before it).
            # TODO(synk): expose the pass-through tail if callers ever need it.
            xq = xq[..., : self.head_dim]
            xk = xk[..., : self.head_dim]
        cos = lax.dynamic_slice_in_dim(self.cos_full, start_pos, seqlen, axis=0)
        sin = lax.dynamic_slice_in_dim(self.sin_signed, start_pos, seqlen, axis=0)
        return rope_pallas(xq, xk, cos, sin)


# ------------------------- independent numpy ref --------------------------- #

def ref_rope_np(x, cos, sin):
    """Replicates the torch complex path (reshape/transpose/view_as_complex)."""
    x = np.asarray(x, np.float32)
    B, S, H, D = x.shape
    dh = D // 2
    xc = x.reshape(B, S, H, 2, dh).transpose(0, 1, 2, 4, 3)      # (B,S,H,dh,2)
    xc = xc[..., 0] + 1j * xc[..., 1]
    fc = np.asarray(cos, np.float32) + 1j * np.asarray(sin, np.float32)
    out = xc * fc[None, :, None, :]
    out = np.stack([out.real, out.imag], axis=-1)                # (B,S,H,dh,2)
    out = out.transpose(0, 1, 2, 4, 3).reshape(B, S, H, D)
    return out.astype(np.float32)


# ----------------------------------- test ---------------------------------- #

def _run_case(B, S, H, D, max_seq_len, start_pos, dtype, tol):
    kq, kk = jax.random.split(jax.random.PRNGKey(0))
    xq = jax.random.normal(kq, (B, S, H, D), dtype=jnp.float32).astype(dtype)
    xk = jax.random.normal(kk, (B, S, H, D), dtype=jnp.float32).astype(dtype)

    rope = RoPE(D, max_seq_len, rope_theta=10000.0)
    oq, ok = rope(xq, xk, start_pos=start_pos, seqlen=S)
    jax.block_until_ready((oq, ok))

    dh = D // 2
    cos_np = np.asarray(rope.cos_full)[start_pos:start_pos + S, :dh]
    sin_np = np.asarray(rope.sin_signed)[start_pos:start_pos + S, dh:]
    xq_np = np.asarray(xq).astype(np.float32)
    xk_np = np.asarray(xk).astype(np.float32)
    ref_q = ref_rope_np(xq_np, cos_np, sin_np)
    ref_k = ref_rope_np(xk_np, cos_np, sin_np)

    np.testing.assert_allclose(np.asarray(oq).astype(np.float32), ref_q,
                               rtol=tol, atol=tol)
    np.testing.assert_allclose(np.asarray(ok).astype(np.float32), ref_k,
                               rtol=tol, atol=tol)


if __name__ == "__main__":
    # f32, head_dim=32, 4 heads -> folded path, H*D = 128 (lane-dense output).
    _run_case(B=2, S=8, H=4, D=32, max_seq_len=16, start_pos=3,
              dtype=jnp.float32, tol=1e-5)
    # bf16, head_dim=128, 2 heads -> folded path (few heads), H*D = 256.
    _run_case(B=2, S=16, H=2, D=128, max_seq_len=32, start_pos=5,
              dtype=jnp.bfloat16, tol=2e-2)
    # f32, head_dim=128, 8 heads -> heads-minor path (D%128==0, H%8==0).
    _run_case(B=2, S=16, H=8, D=128, max_seq_len=32, start_pos=7,
              dtype=jnp.float32, tol=1e-5)
    print("KERNEL_OK")
</pallas_src>

<mosaic_0001>
module attributes {stable_mosaic.version = 11 : i64} {
  func.func @_rope_kernel_folded(%arg0: i32, %arg1: i32, %arg2: memref<8x32xf32, #tpu.memory_space<vmem>>, %arg3: memref<8x32xf32, #tpu.memory_space<vmem>>, %arg4: memref<1x8x128xf32, #tpu.memory_space<vmem>>, %arg5: memref<1x8x128xf32, #tpu.memory_space<vmem>>, %arg6: memref<1x8x128xf32, #tpu.memory_space<vmem>>, %arg7: memref<1x8x128xf32, #tpu.memory_space<vmem>>) attributes {dimension_semantics = [#tpu.dimension_semantics<parallel>, #tpu.dimension_semantics<parallel>], iteration_bounds = array<i64: 1, 2>, scalar_prefetch = 0 : i64, scratch_operands = 0 : i64, tpu.core_type = #tpu.core_type<tc>, window_params = [{transform_indices = @transform_0, window_bounds = array<i64: 8, 32>}, {transform_indices = @transform_1, window_bounds = array<i64: 8, 32>}, {transform_indices = @transform_2, window_bounds = array<i64: 1, 8, 128>}, {transform_indices = @transform_3, window_bounds = array<i64: 1, 8, 128>}, {transform_indices = @transform_4, window_bounds = array<i64: 1, 8, 128>}, {transform_indices = @transform_5, window_bounds = array<i64: 1, 8, 128>}]} {
    %c0 = arith.constant 0 : index
    %c0_0 = arith.constant 0 : index
    %0 = vector.load %arg2[%c0, %c0_0] : memref<8x32xf32, #tpu.memory_space<vmem>>, vector<8x32xf32>
    %c0_1 = arith.constant 0 : index
    %c0_2 = arith.constant 0 : index
    %1 = vector.load %arg3[%c0_1, %c0_2] : memref<8x32xf32, #tpu.memory_space<vmem>>, vector<8x32xf32>
    %2 = tpu.concatenate %0, %0, %0, %0 in 1 : vector<8x32xf32>, vector<8x32xf32>, vector<8x32xf32>, vector<8x32xf32> -> vector<8x128xf32>
    %3 = vector.shape_cast %2 : vector<8x128xf32> to vector<1x8x128xf32>
    %4 = tpu.concatenate %1, %1, %1, %1 in 1 : vector<8x32xf32>, vector<8x32xf32>, vector<8x32xf32>, vector<8x32xf32> -> vector<8x128xf32>
    %5 = vector.shape_cast %4 : vector<8x128xf32> to vector<1x8x128xf32>
    %c0_3 = arith.constant 0 : index
    %c0_4 = arith.constant 0 : index
    %c0_5 = arith.constant 0 : index
    %6 = vector.load %arg4[%c0_3, %c0_4, %c0_5] : memref<1x8x128xf32, #tpu.memory_space<vmem>>, vector<1x8x128xf32>
    %7 = vector.extract_strided_slice %6 {offsets = [0, 0, 16], sizes = [1, 8, 16], strides = [1, 1, 1]} : vector<1x8x128xf32> to vector<1x8x16xf32>
    %8 = vector.extract_strided_slice %6 {offsets = [0, 0, 0], sizes = [1, 8, 16], strides = [1, 1, 1]} : vector<1x8x128xf32> to vector<1x8x16xf32>
    %9 = vector.extract_strided_slice %6 {offsets = [0, 0, 48], sizes = [1, 8, 16], strides = [1, 1, 1]} : vector<1x8x128xf32> to vector<1x8x16xf32>
    %10 = vector.extract_strided_slice %6 {offsets = [0, 0, 32], sizes = [1, 8, 16], strides = [1, 1, 1]} : vector<1x8x128xf32> to vector<1x8x16xf32>
    %11 = vector.extract_strided_slice %6 {offsets = [0, 0, 80], sizes = [1, 8, 16], strides = [1, 1, 1]} : vector<1x8x128xf32> to vector<1x8x16xf32>
    %12 = vector.extract_strided_slice %6 {offsets = [0, 0, 64], sizes = [1, 8, 16], strides = [1, 1, 1]} : vector<1x8x128xf32> to vector<1x8x16xf32>
    %13 = vector.extract_strided_slice %6 {offsets = [0, 0, 112], sizes = [1, 8, 16], strides = [1, 1, 1]} : vector<1x8x128xf32> to vector<1x8x16xf32>
    %14 = vector.extract_strided_slice %6 {offsets = [0, 0, 96], sizes = [1, 8, 16], strides = [1, 1, 1]} : vector<1x8x128xf32> to vector<1x8x16xf32>
    %15 = tpu.concatenate %7, %8, %9, %10, %11, %12, %13, %14 in 2 : vector<1x8x16xf32>, vector<1x8x16xf32>, vector<1x8x16xf32>, vector<1x8x16xf32>, vector<1x8x16xf32>, vector<1x8x16xf32>, vector<1x8x16xf32>, vector<1x8x16xf32> -> vector<1x8x128xf32>
    %16 = arith.mulf %6, %3 : vector<1x8x128xf32>
    %17 = arith.mulf %15, %5 : vector<1x8x128xf32>
    %18 = arith.addf %16, %17 : vector<1x8x128xf32>
    %c0_6 = arith.constant 0 : index
    %c0_7 = arith.constant 0 : index
    %c0_8 = arith.constant 0 : index
    %19 = vector.load %arg6[%c0_6, %c0_7, %c0_8] : memref<1x8x128xf32, #tpu.memory_space<vmem>>, vector<1x8x128xf32>
    tpu.vector_store %arg6[%c0_6, %c0_7, %c0_8], %18 {strides = array<i32>} : memref<1x8x128xf32, #tpu.memory_space<vmem>>, vector<1x8x128xf32>,
    %c0_9 = arith.constant 0 : index
    %c0_10 = arith.constant 0 : index
    %c0_11 = arith.constant 0 : index
    %20 = vector.load %arg5[%c0_9, %c0_10, %c0_11] : memref<1x8x128xf32, #tpu.memory_space<vmem>>, vector<1x8x128xf32>
    %21 = vector.extract_strided_slice %20 {offsets = [0, 0, 16], sizes = [1, 8, 16], strides = [1, 1, 1]} : vector<1x8x128xf32> to vector<1x8x16xf32>
    %22 = vector.extract_strided_slice %20 {offsets = [0, 0, 0], sizes = [1, 8, 16], strides = [1, 1, 1]} : vector<1x8x128xf32> to vector<1x8x16xf32>
    %23 = vector.extract_strided_slice %20 {offsets = [0, 0, 48], sizes = [1, 8, 16], strides = [1, 1, 1]} : vector<1x8x128xf32> to vector<1x8x16xf32>
    %24 = vector.extract_strided_slice %20 {offsets = [0, 0, 32], sizes = [1, 8, 16], strides = [1, 1, 1]} : vector<1x8x128xf32> to vector<1x8x16xf32>
    %25 = vector.extract_strided_slice %20 {offsets = [0, 0, 80], sizes = [1, 8, 16], strides = [1, 1, 1]} : vector<1x8x128xf32> to vector<1x8x16xf32>
    %26 = vector.extract_strided_slice %20 {offsets = [0, 0, 64], sizes = [1, 8, 16], strides = [1, 1, 1]} : vector<1x8x128xf32> to vector<1x8x16xf32>
    %27 = vector.extract_strided_slice %20 {offsets = [0, 0, 112], sizes = [1, 8, 16], strides = [1, 1, 1]} : vector<1x8x128xf32> to vector<1x8x16xf32>
    %28 = vector.extract_strided_slice %20 {offsets = [0, 0, 96], sizes = [1, 8, 16], strides = [1, 1, 1]} : vector<1x8x128xf32> to vector<1x8x16xf32>
    %29 = tpu.concatenate %21, %22, %23, %24, %25, %26, %27, %28 in 2 : vector<1x8x16xf32>, vector<1x8x16xf32>, vector<1x8x16xf32>, vector<1x8x16xf32>, vector<1x8x16xf32>, vector<1x8x16xf32>, vector<1x8x16xf32>, vector<1x8x16xf32> -> vector<1x8x128xf32>
    %30 = arith.mulf %20, %3 : vector<1x8x128xf32>
    %31 = arith.mulf %29, %5 : vector<1x8x128xf32>
    %32 = arith.addf %30, %31 : vector<1x8x128xf32>
    %c0_12 = arith.constant 0 : index
    %c0_13 = arith.constant 0 : index
    %c0_14 = arith.constant 0 : index
    %33 = vector.load %arg7[%c0_12, %c0_13, %c0_14] : memref<1x8x128xf32, #tpu.memory_space<vmem>>, vector<1x8x128xf32>
    tpu.vector_store %arg7[%c0_12, %c0_13, %c0_14], %32 {strides = array<i32>} : memref<1x8x128xf32, #tpu.memory_space<vmem>>, vector<1x8x128xf32>,
    return
  }
  func.func @transform_0(%arg0: i32, %arg1: i32) -> (i32, i32) {
    %c0_i32 = arith.constant 0 : i32
    %c0_i32_0 = arith.constant 0 : i32
    return %arg0, %c0_i32 : i32, i32
  }
  func.func @transform_1(%arg0: i32, %arg1: i32) -> (i32, i32) {
    %c0_i32 = arith.constant 0 : i32
    %c0_i32_0 = arith.constant 0 : i32
    return %arg0, %c0_i32 : i32, i32
  }
  func.func @transform_2(%arg0: i32, %arg1: i32) -> (i32, i32, i32) {
    %c0_i32 = arith.constant 0 : i32
    %c0_i32_0 = arith.constant 0 : i32
    return %arg1, %arg0, %c0_i32 : i32, i32, i32
  }
  func.func @transform_3(%arg0: i32, %arg1: i32) -> (i32, i32, i32) {
    %c0_i32 = arith.constant 0 : i32
    %c0_i32_0 = arith.constant 0 : i32
    return %arg1, %arg0, %c0_i32 : i32, i32, i32
  }
  func.func @transform_4(%arg0: i32, %arg1: i32) -> (i32, i32, i32) {
    %c0_i32 = arith.constant 0 : i32
    %c0_i32_0 = arith.constant 0 : i32
    return %arg1, %arg0, %c0_i32 : i32, i32, i32
  }
  func.func @transform_5(%arg0: i32, %arg1: i32) -> (i32, i32, i32) {
    %c0_i32 = arith.constant 0 : i32
    %c0_i32_0 = arith.constant 0 : i32
    return %arg1, %arg0, %c0_i32 : i32, i32, i32
  }
}

</mosaic_0001>

<llo_original>
// kernel: tpu_custom_call.1
$region0: #{tpu_custom_call.1}
  #allocation0 [shape = 'u32[]', space=smem, size = 0x4, offset = 0x4, fixed_abs, tag = 'smem constant byte address 0x4 - core index']
  #allocation1 [shape = 'u32[72,128]{1,0:T(1,128)}', space=vmem, size = 0x9000, scoped, tag = 'internal scratch']
  %s0 = inlined_call_operand.hbm [shape: f32[8,32], index: 0, kind: input, shape index: {}]
  %s1 = inlined_call_operand.hbm [shape: f32[8,32], index: 1, kind: input, shape index: {}]
  %s2 = inlined_call_operand.hbm [shape: f32[2,8,128], index: 2, kind: input, shape index: {}]
  %s3 = inlined_call_operand.hbm [shape: f32[2,8,128], index: 3, kind: input, shape index: {}]
  %s4 = inlined_call_operand.hbm [shape: f32[2,8,128], index: 4, kind: output, shape index: {0}]
  %s5 = inlined_call_operand.hbm [shape: f32[2,8,128], index: 5, kind: output, shape index: {1}]
  %6 = xla_tuple %s4, %s5
  %s7 = sld [smem:[#allocation0]]
  $region73: #{tpu_custom_call.1} parent=0
    _
  %s9 = ssub.s32 1, %s7
  %s10 = scalar_select 0, %s9, %s7
  $region1: #{tpu_custom_call.1} parent=0
    #allocation2 [shape = 'u8[4096]{0}', space=vmem, size = 0x1000, scoped, tag = 'input window, operand 0, single buffered']
    #allocation3 [shape = 's32[2]{0}', space=sflag, size = 0x8, scoped, tag = 'scoped memory for tpu_custom_call.1']
    #allocation4 [shape = 's32[2]{0}', space=sflag, size = 0x8, scoped, tag = 'scoped memory for tpu_custom_call.1']
    #allocation5 [shape = 'u8[4096]{0}', space=vmem, size = 0x1000, scoped, tag = 'input window, operand 1, single buffered']
    #allocation6 [shape = 's32[1]{0}', space=sflag, size = 0x4, scoped, tag = 'scoped memory for tpu_custom_call.1']
    #allocation7 [shape = 'u8[8192]{0}', space=vmem, size = 0x2000, scoped, tag = 'input window, operand 2']
    #allocation8 [shape = 'u8[8192]{0}', space=vmem, size = 0x2000, scoped, tag = 'input window, operand 3']
    #allocation9 [shape = 'u8[8192]{0}', space=vmem, size = 0x2000, scoped, tag = 'output window, operand 0']
    #allocation10 [shape = 'u8[8192]{0}', space=vmem, size = 0x2000, scoped, tag = 'output window, operand 1']
    #allocation11 [shape = 's32[2]{0}', space=sflag, size = 0x8, scoped, tag = 'scoped memory for tpu_custom_call.1']
    %11 = vsyncpa [#allocation3], 0
    %12 = vsyncpa [#allocation6], 0
    %13 = vsyncpa [#allocation4], 0
    %s14 = scalar_lea.sflag [#allocation4], 1
    %15 = vsyncpa %s14, 0
    %16 = vsyncpa [#allocation11], 0
    %s17 = scalar_lea.sflag [#allocation11], 1
    %18 = vsyncpa %s17, 0
    loop: start=0, step=1, limit=4
    $region2: #{tpu_custom_call.1} parent=1 // loop_pre_header
      _
    $region3: #{tpu_custom_call.1} parent=1 // loop_header
      %s20 = sphi 0, %s24
      %p21 = scmp.ge.s32.totalorder %s20, 4
      %s27 = sphi 0, %s39
      %s28 = sphi 0, %s35
      %s29 = sphi 0, %s27
      %s30 = sphi 0, %s28
      %s31 = sphi 0, %s29
      %s32 = sphi 0, %s30
      %s42 = sphi 0, %s44
      %s45 = sphi 0, %s42
      %s46 = sphi 0, %s45
      %s62 = sphi 0, %s46
      %s68 = sphi 0, %s70
      %s71 = sphi 0, %s68
      %s72 = sphi 0, %s71
      %s88 = sphi 0, %s72
      %s96 = sphi 0, %s98
      %s99 = sphi 0, %s96
      %s100 = sphi 0, %s99
      %s116 = sphi 0, %s100
      %s124 = sphi 0, %s126
      %s127 = sphi 0, %s124
      %s128 = sphi 0, %s127
      %s144 = sphi 0, %s128
      %s152 = sphi 0, %s154
      %s155 = sphi 0, %s152
      %s156 = sphi 0, %s155
      %s172 = sphi 0, %s156
      %s180 = sphi 0, %s182
      %s183 = sphi 0, %s180
      %s184 = sphi 0, %s183
      %s200 = sphi 0, %s184
    $region4: #{tpu_custom_call.1} parent=1 // loop_header_branch
      %23 = sbr.rel (%p21) target = $region8
    $region5: #{tpu_custom_call.1} parent=1 // loop_body
      %s25 = ssub.s32 %s20, 1
      %s26 = ssub.s32 %s20, 2
      %s33 = sadd.s32 1, %s28
      %p34 = scmp.ge.s32.totalorder %s33, 2
      %s35 = scalar_select %p34, 0, %s33
      %s36 = sadd.s32 1, %s27
      %s37 = scalar_select %p34, %s36, %s27
      %p38 = scmp.ge.s32.totalorder %s37, 1
      %s39 = scalar_select %p38, 0, %s37
      %s40 = ssub.s32 %s27, %s39
      %p41 = scmp.eq.s32.totalorder %s40, 0
      %s43 = sadd.s32 %s42, 1
      %s44 = scalar_select %p41, %s42, %s43
      %p47 = pneg %p41
      %p48 = scmp.eq.s32.totalorder %s20, 1
      %p49 = por %p47, %p48
      %p50 = scmp.ne.s32.totalorder %s42, %s45
      %p51 = scmp.eq.s32.totalorder %s20, 0
      %p52 = por %p50, %p51
      %p53 = scmp.ne.s32.totalorder %s42, %s45
      %p54 = scmp.eq.s32.totalorder %s25, 1
      %p55 = por %p53, %p54
      %p56 = scmp.ne.s32.totalorder %s45, %s46
      %p57 = scmp.eq.s32.totalorder %s25, 0
      %p58 = por %p56, %p57
      %p59 = scmp.ne.s32.totalorder %s45, %s46
      %p60 = scmp.eq.s32.totalorder %s26, 1
      %p61 = por %p59, %p60
      %p63 = scmp.ne.s32.totalorder %s46, %s62
      %p64 = scmp.eq.s32.totalorder %s26, 0
      %p65 = por %p63, %p64
      %s66 = ssub.s32 %s27, %s39
      %p67 = scmp.eq.s32.totalorder %s66, 0
      %s69 = sadd.s32 %s68, 1
      %s70 = scalar_select %p67, %s68, %s69
      %p73 = pneg %p67
      %p74 = scmp.eq.s32.totalorder %s20, 1
      %p75 = por %p73, %p74
      %p76 = scmp.ne.s32.totalorder %s68, %s71
      %p77 = scmp.eq.s32.totalorder %s20, 0
      %p78 = por %p76, %p77
      %p79 = scmp.ne.s32.totalorder %s68, %s71
      %p80 = scmp.eq.s32.totalorder %s25, 1
      %p81 = por %p79, %p80
      %p82 = scmp.ne.s32.totalorder %s71, %s72
      %p83 = scmp.eq.s32.totalorder %s25, 0
      %p84 = por %p82, %p83
      %p85 = scmp.ne.s32.totalorder %s71, %s72
      %p86 = scmp.eq.s32.totalorder %s26, 1
      %p87 = por %p85, %p86
      %p89 = scmp.ne.s32.totalorder %s72, %s88
      %p90 = scmp.eq.s32.totalorder %s26, 0
      %p91 = por %p89, %p90
      %s92 = ssub.s32 %s28, %s35
      %s93 = ssub.s32 %s27, %s39
      %s94 = sor.u32 %s92, %s93
      %p95 = scmp.eq.s32.totalorder %s94, 0
      %s97 = sadd.s32 %s96, 1
      %s98 = scalar_select %p95, %s96, %s97
      %p101 = pneg %p95
      %p102 = scmp.eq.s32.totalorder %s20, 1
      %p103 = por %p101, %p102
      %p104 = scmp.ne.s32.totalorder %s96, %s99
      %p105 = scmp.eq.s32.totalorder %s20, 0
      %p106 = por %p104, %p105
      %p107 = scmp.ne.s32.totalorder %s96, %s99
      %p108 = scmp.eq.s32.totalorder %s25, 1
      %p109 = por %p107, %p108
      %p110 = scmp.ne.s32.totalorder %s99, %s100
      %p111 = scmp.eq.s32.totalorder %s25, 0
      %p112 = por %p110, %p111
      %p113 = scmp.ne.s32.totalorder %s99, %s100
      %p114 = scmp.eq.s32.totalorder %s26, 1
      %p115 = por %p113, %p114
      %p117 = scmp.ne.s32.totalorder %s100, %s116
      %p118 = scmp.eq.s32.totalorder %s26, 0
      %p119 = por %p117, %p118
      %s120 = ssub.s32 %s28, %s35
      %s121 = ssub.s32 %s27, %s39
      %s122 = sor.u32 %s120, %s121
      %p123 = scmp.eq.s32.totalorder %s122, 0
      %s125 = sadd.s32 %s124, 1
      %s126 = scalar_select %p123, %s124, %s125
      %p129 = pneg %p123
      %p130 = scmp.eq.s32.totalorder %s20, 1
      %p131 = por %p129, %p130
      %p132 = scmp.ne.s32.totalorder %s124, %s127
      %p133 = scmp.eq.s32.totalorder %s20, 0
      %p134 = por %p132, %p133
      %p135 = scmp.ne.s32.totalorder %s124, %s127
      %p136 = scmp.eq.s32.totalorder %s25, 1
      %p137 = por %p135, %p136
      %p138 = scmp.ne.s32.totalorder %s127, %s128
      %p139 = scmp.eq.s32.totalorder %s25, 0
      %p140 = por %p138, %p139
      %p141 = scmp.ne.s32.totalorder %s127, %s128
      %p142 = scmp.eq.s32.totalorder %s26, 1
      %p143 = por %p141, %p142
      %p145 = scmp.ne.s32.totalorder %s128, %s144
      %p146 = scmp.eq.s32.totalorder %s26, 0
      %p147 = por %p145, %p146
      %s148 = ssub.s32 %s28, %s35
      %s149 = ssub.s32 %s27, %s39
      %s150 = sor.u32 %s148, %s149
      %p151 = scmp.eq.s32.totalorder %s150, 0
      %s153 = sadd.s32 %s152, 1
      %s154 = scalar_select %p151, %s152, %s153
      %p157 = pneg %p151
      %p158 = scmp.eq.s32.totalorder %s20, 1
      %p159 = por %p157, %p158
      %p160 = scmp.ne.s32.totalorder %s152, %s155
      %p161 = scmp.eq.s32.totalorder %s20, 0
      %p162 = por %p160, %p161
      %p163 = scmp.ne.s32.totalorder %s152, %s155
      %p164 = scmp.eq.s32.totalorder %s25, 1
      %p165 = por %p163, %p164
      %p166 = scmp.ne.s32.totalorder %s155, %s156
      %p167 = scmp.eq.s32.totalorder %s25, 0
      %p168 = por %p166, %p167
      %p169 = scmp.ne.s32.totalorder %s155, %s156
      %p170 = scmp.eq.s32.totalorder %s26, 1
      %p171 = por %p169, %p170
      %p173 = scmp.ne.s32.totalorder %s156, %s172
      %p174 = scmp.eq.s32.totalorder %s26, 0
      %p175 = por %p173, %p174
      %s176 = ssub.s32 %s28, %s35
      %s177 = ssub.s32 %s27, %s39
      %s178 = sor.u32 %s176, %s177
      %p179 = scmp.eq.s32.totalorder %s178, 0
      %s181 = sadd.s32 %s180, 1
      %s182 = scalar_select %p179, %s180, %s181
      %p185 = pneg %p179
      %p186 = scmp.eq.s32.totalorder %s20, 1
      %p187 = por %p185, %p186
      %p188 = scmp.ne.s32.totalorder %s180, %s183
      %p189 = scmp.eq.s32.totalorder %s20, 0
      %p190 = por %p188, %p189
      %p191 = scmp.ne.s32.totalorder %s180, %s183
      %p192 = scmp.eq.s32.totalorder %s25, 1
      %p193 = por %p191, %p192
      %p194 = scmp.ne.s32.totalorder %s183, %s184
      %p195 = scmp.eq.s32.totalorder %s25, 0
      %p196 = por %p194, %p195
      %p197 = scmp.ne.s32.totalorder %s183, %s184
      %p198 = scmp.eq.s32.totalorder %s26, 1
      %p199 = por %p197, %p198
      %p201 = scmp.ne.s32.totalorder %s184, %s200
      %p202 = scmp.eq.s32.totalorder %s26, 0
      %p203 = por %p201, %p202
      %p204 = scmp.le.s32.totalorder 1, %s20
      %p205 = scmp.lt.s32.totalorder %s20, 3
      %p206 = pnand %p204, %p205
      %p207 = pneg %p206
      // Predicated region
      $region9: #{tpu_custom_call.1} parent=5 // pred_check
        _
      $region10: #{tpu_custom_call.1} parent=5 // pred_check_branch
        %209 = sbr.rel (%p206) target = $region12
      $region11: #{tpu_custom_call.1} parent=5 // pred_region
        %s210 = ssub.s32 %s20, 1
        // Predicated region
        $region13: #{tpu_custom_call.1} parent=11 // pred_check
          %p211 = pneg %p58
        $region14: #{tpu_custom_call.1} parent=11 // pred_check_branch
          %213 = sbr.rel (%p211) target = $region16
        $region15: #{tpu_custom_call.1} parent=11 // pred_region
          %215 = vsyncadd [#allocation3], 0
          %s216 = smul.addr %s29, 8
          %s217 = scalar_lea.hbm %s0, %s216
          %s219 = sshll.u32 %s217, 4
          %s220 = int_to_ptr.hbm [resolvable:$true] %s219
          %s221 = sshll.u32 [#allocation2], 4
          %s222 = int_to_ptr.vmem [resolvable:$true] %s221
          %224 = dma.hbm_to_vmem [thread:$0]  %s220, 128, %s222, [#allocation3]
        $region16: #{tpu_custom_call.1} parent=11 // pred_fallthru
          _
        // Predicated region
        $region17: #{tpu_custom_call.1} parent=11 // pred_check
          %p225 = pneg %p84
        $region18: #{tpu_custom_call.1} parent=11 // pred_check_branch
          %227 = sbr.rel (%p225) target = $region20
        $region19: #{tpu_custom_call.1} parent=11 // pred_region
          %229 = vsyncadd [#allocation6], 0
          %s230 = smul.addr %s29, 8
          %s231 = scalar_lea.hbm %s1, %s230
          %s233 = sshll.u32 %s231, 4
          %s234 = int_to_ptr.hbm [resolvable:$true] %s233
          %s235 = sshll.u32 [#allocation5], 4
          %s236 = int_to_ptr.vmem [resolvable:$true] %s235
          %238 = dma.hbm_to_vmem [thread:$0]  %s234, 128, %s236, [#allocation6]
        $region20: #{tpu_custom_call.1} parent=11 // pred_fallthru
          _
      $region12: #{tpu_custom_call.1} parent=5 // pred_fallthru
        _
      %p239 = scmp.lt.s32.totalorder %s20, 2
      // Predicated region
      $region21: #{tpu_custom_call.1} parent=5 // pred_check
        %p240 = pneg %p239
      $region22: #{tpu_custom_call.1} parent=5 // pred_check_branch
        %242 = sbr.rel (%p240) target = $region24
      $region23: #{tpu_custom_call.1} parent=5 // pred_region
        // Predicated region
        $region25: #{tpu_custom_call.1} parent=23 // pred_check
          %p243 = pneg %p106
        $region26: #{tpu_custom_call.1} parent=23 // pred_check_branch
          %245 = sbr.rel (%p243) target = $region28
        $region27: #{tpu_custom_call.1} parent=23 // pred_region
          %s246 = sand.u32 %s20, 1
          %s247 = scalar_lea.sflag [#allocation3], %s246
          %s248 = sand.u32 %s96, 1
          %s249 = smul.addr %s248, 8
          %s250 = scalar_lea.vmem [#allocation7], %s249
          %252 = vsyncadd %s247, 0
          %s253 = sadd.s32 %s27, %s28
          %s254 = smul.addr %s253, 8
          %s255 = scalar_lea.hbm %s2, %s254
          %s257 = sshll.u32 %s255, 4
          %s258 = int_to_ptr.hbm [resolvable:$true] %s257
          %s259 = sshll.u32 %s250, 4
          %s260 = int_to_ptr.vmem [resolvable:$true] %s259
          %262 = dma.hbm_to_vmem [thread:$0]  %s258, 128, %s260, %s247
        $region28: #{tpu_custom_call.1} parent=23 // pred_fallthru
          _
        // Predicated region
        $region29: #{tpu_custom_call.1} parent=23 // pred_check
          %p263 = pneg %p134
        $region30: #{tpu_custom_call.1} parent=23 // pred_check_branch
          %265 = sbr.rel (%p263) target = $region32
        $region31: #{tpu_custom_call.1} parent=23 // pred_region
          %s266 = sand.u32 %s20, 1
          %s267 = scalar_lea.sflag [#allocation3], %s266
          %s268 = sand.u32 %s124, 1
          %s269 = smul.addr %s268, 8
          %s270 = scalar_lea.vmem [#allocation8], %s269
          %272 = vsyncadd %s267, 0
          %s273 = sadd.s32 %s27, %s28
          %s274 = smul.addr %s273, 8
          %s275 = scalar_lea.hbm %s3, %s274
          %s277 = sshll.u32 %s275, 4
          %s278 = int_to_ptr.hbm [resolvable:$true] %s277
          %s279 = sshll.u32 %s270, 4
          %s280 = int_to_ptr.vmem [resolvable:$true] %s279
          %282 = dma.hbm_to_vmem [thread:$0]  %s278, 128, %s280, %s267
        $region32: #{tpu_custom_call.1} parent=23 // pred_fallthru
          _
      $region24: #{tpu_custom_call.1} parent=5 // pred_fallthru
        _
      %p283 = scmp.le.s32.totalorder 1, %s20
      %p284 = scmp.lt.s32.totalorder %s20, 3
      %p285 = pnand %p283, %p284
      %p286 = pneg %p285
      // Predicated region
      $region33: #{tpu_custom_call.1} parent=5 // pred_check
        _
      $region34: #{tpu_custom_call.1} parent=5 // pred_check_branch
        %288 = sbr.rel (%p285) target = $region36
      $region35: #{tpu_custom_call.1} parent=5 // pred_region
        %s289 = ssub.s32 %s20, 1
        // Predicated region
        $region37: #{tpu_custom_call.1} parent=35 // pred_check
          %p290 = pneg %p58
        $region38: #{tpu_custom_call.1} parent=35 // pred_check_branch
          %292 = sbr.rel (%p290) target = $region40
        $region39: #{tpu_custom_call.1} parent=35 // pred_region
          %294 = dma.done [#allocation3], 128
        $region40: #{tpu_custom_call.1} parent=35 // pred_fallthru
          _
        // Predicated region
        $region41: #{tpu_custom_call.1} parent=35 // pred_check
          %p295 = pneg %p84
        $region42: #{tpu_custom_call.1} parent=35 // pred_check_branch
          %297 = sbr.rel (%p295) target = $region44
        $region43: #{tpu_custom_call.1} parent=35 // pred_region
          %299 = dma.done [#allocation6], 128
        $region44: #{tpu_custom_call.1} parent=35 // pred_fallthru
          _
        %s300 = sand.u32 %s25, 1
        %s301 = scalar_lea.sflag [#allocation3], %s300
        %s302 = sand.u32 %s99, 1
        %s303 = smul.addr %s302, 8
        %s304 = scalar_lea.vmem [#allocation7], %s303
        // Predicated region
        $region45: #{tpu_custom_call.1} parent=35 // pred_check
          %p305 = pneg %p112
        $region46: #{tpu_custom_call.1} parent=35 // pred_check_branch
          %307 = sbr.rel (%p305) target = $region48
        $region47: #{tpu_custom_call.1} parent=35 // pred_region
          %309 = dma.done %s301, 128
        $region48: #{tpu_custom_call.1} parent=35 // pred_fallthru
          _
        %s310 = sand.u32 %s25, 1
        %s311 = scalar_lea.sflag [#allocation3], %s310
        %s312 = sand.u32 %s127, 1
        %s313 = smul.addr %s312, 8
        %s314 = scalar_lea.vmem [#allocation8], %s313
        // Predicated region
        $region49: #{tpu_custom_call.1} parent=35 // pred_check
          %p315 = pneg %p140
        $region50: #{tpu_custom_call.1} parent=35 // pred_check_branch
          %317 = sbr.rel (%p315) target = $region52
        $region51: #{tpu_custom_call.1} parent=35 // pred_region
          %319 = dma.done %s311, 128
        $region52: #{tpu_custom_call.1} parent=35 // pred_fallthru
          _
        %p320 = pneg %p58
        %p321 = pneg %p55
        %p322 = pneg %p84
        %p323 = pneg %p81
        %s324 = sand.u32 %s25, 1
        %s325 = scalar_lea.sflag [#allocation3], %s324
        %s326 = sand.u32 %s99, 1
        %s327 = smul.addr %s326, 8
        %s328 = scalar_lea.vmem [#allocation7], %s327
        %p329 = pneg %p112
        %p330 = pneg %p109
        %s331 = sand.u32 %s25, 1
        %s332 = scalar_lea.sflag [#allocation3], %s331
        %s333 = sand.u32 %s127, 1
        %s334 = smul.addr %s333, 8
        %s335 = scalar_lea.vmem [#allocation8], %s334
        %p336 = pneg %p140
        %p337 = pneg %p137
        %p338 = pneg %p168
        %p339 = pneg %p165
        %s340 = sand.u32 %s155, 1
        %s341 = scalar_lea.sflag [#allocation4], %s340
        %s342 = sand.u32 %s155, 1
        %s343 = smul.addr %s342, 8
        %s344 = scalar_lea.vmem [#allocation9], %s343
        %p345 = pneg %p196
        %p346 = pneg %p193
        %s347 = sand.u32 %s183, 1
        %s348 = scalar_lea.sflag [#allocation11], %s347
        %s349 = sand.u32 %s183, 1
        %s350 = smul.addr %s349, 8
        %s351 = scalar_lea.vmem [#allocation10], %s350
        %v352 = vld [vmem:[#allocation2] sm:$0xff]
        %v353 = vld [vmem:[#allocation5] sm:$0xff]
        %355 = vrot.lane.b32.xlu0 %v352, 32
        %v356 = vpop.permute.xlu0 %355
        %358 = vrot.lane.b32.xlu0 %v352, 64
        %v359 = vpop.permute.xlu0 %358
        %361 = vrot.lane.b32.xlu0 %v352, 96
        %v362 = vpop.permute.xlu0 %361
        %vm364 = vcmask 261120
        %v365 = vsel %vm364, %v352, %v356
        %vm366 = vcmask 523264
        %v367 = vsel %vm366, %v365, %v359
        %vm368 = vcmask 785408
        %v369 = vsel %vm368, %v367, %v362
        %371 = vrot.lane.b32.xlu0 %v353, 32
        %v372 = vpop.permute.xlu0 %371
        %374 = vrot.lane.b32.xlu0 %v353, 64
        %v375 = vpop.permute.xlu0 %374
        %377 = vrot.lane.b32.xlu0 %v353, 96
        %v378 = vpop.permute.xlu0 %377
        %v380 = vsel %vm364, %v353, %v372
        %v381 = vsel %vm366, %v380, %v375
        %v382 = vsel %vm368, %v381, %v378
        %v383 = vld [vmem:[%s304] sm:$0xff]
        %385 = vrot.lane.b32.xlu0 %v383, 112
        %v386 = vpop.permute.xlu0 %385
        %388 = vrot.lane.b32.xlu0 %v383, 16
        %v389 = vpop.permute.xlu0 %388
        %vm391 = vcmask 130048
        %v392 = vsel %vm391, %v386, %v389
        %v393 = vsel %vm364, %v392, %v386
        %vm394 = vcmask 392192
        %v395 = vsel %vm394, %v393, %v389
        %v396 = vsel %vm366, %v395, %v386
        %vm397 = vcmask 654336
        %v398 = vsel %vm397, %v396, %v389
        %v399 = vsel %vm368, %v398, %v386
        %vm400 = vcmask 916480
        %v401 = vsel %vm400, %v399, %v389
        %v402 = vmul.f32 %v383, %v369
        %v403 = vmul.f32 %v401, %v382
        %v404 = vadd.f32 %v402, %v403
        %405 = vst [vmem:[%s344] sm:$0xff] %v404
        %v406 = vld [vmem:[%s314] sm:$0xff]
        %408 = vrot.lane.b32.xlu0 %v406, 112
        %v409 = vpop.permute.xlu0 %408
        %411 = vrot.lane.b32.xlu0 %v406, 16
        %v412 = vpop.permute.xlu0 %411
        %v414 = vsel %vm391, %v409, %v412
        %v415 = vsel %vm364, %v414, %v409
        %v416 = vsel %vm394, %v415, %v412
        %v417 = vsel %vm366, %v416, %v409
        %v418 = vsel %vm397, %v417, %v412
        %v419 = vsel %vm368, %v418, %v409
        %v420 = vsel %vm400, %v419, %v412
        %v421 = vmul.f32 %v406, %v369
        %v422 = vmul.f32 %v420, %v382
        %v423 = vadd.f32 %v421, %v422
        %424 = vst [vmem:[%s351] sm:$0xff] %v423
        %s425 = sand.u32 %s155, 1
        %s426 = scalar_lea.sflag [#allocation4], %s425
        %s427 = sand.u32 %s155, 1
        %s428 = smul.addr %s427, 8
        %s429 = scalar_lea.vmem [#allocation9], %s428
        %s430 = sand.u32 %s183, 1
        %s431 = scalar_lea.sflag [#allocation11], %s430
        %s432 = sand.u32 %s183, 1
        %s433 = smul.addr %s432, 8
        %s434 = scalar_lea.vmem [#allocation10], %s433
        // Predicated region
        $region53: #{tpu_custom_call.1} parent=35 // pred_check
          %p435 = pneg %p165
        $region54: #{tpu_custom_call.1} parent=35 // pred_check_branch
          %437 = sbr.rel (%p435) target = $region56
        $region55: #{tpu_custom_call.1} parent=35 // pred_region
          %439 = vsyncadd %s426, 0
          %s440 = sadd.s32 %s29, %s30
          %s441 = smul.addr %s440, 8
          %s442 = scalar_lea.hbm %s4, %s441
          %s444 = sshll.u32 %s429, 4
          %s445 = int_to_ptr.vmem [resolvable:$true] %s444
          %s446 = sshll.u32 %s442, 4
          %s447 = int_to_ptr.hbm [resolvable:$true] %s446
          %449 = dma.vmem_to_hbm [thread:$0]  %s445, 128, %s447, %s426
        $region56: #{tpu_custom_call.1} parent=35 // pred_fallthru
          _
        // Predicated region
        $region57: #{tpu_custom_call.1} parent=35 // pred_check
          %p450 = pneg %p193
        $region58: #{tpu_custom_call.1} parent=35 // pred_check_branch
          %452 = sbr.rel (%p450) target = $region60
        $region59: #{tpu_custom_call.1} parent=35 // pred_region
          %454 = vsyncadd %s431, 0
          %s455 = sadd.s32 %s29, %s30
          %s456 = smul.addr %s455, 8
          %s457 = scalar_lea.hbm %s5, %s456
          %s459 = sshll.u32 %s434, 4
          %s460 = int_to_ptr.vmem [resolvable:$true] %s459
          %s461 = sshll.u32 %s457, 4
          %s462 = int_to_ptr.hbm [resolvable:$true] %s461
          %464 = dma.vmem_to_hbm [thread:$0]  %s460, 128, %s462, %s431
        $region60: #{tpu_custom_call.1} parent=35 // pred_fallthru
          _
      $region36: #{tpu_custom_call.1} parent=5 // pred_fallthru
        _
      %p465 = scmp.le.s32.totalorder 2, %s20
      // Predicated region
      $region61: #{tpu_custom_call.1} parent=5 // pred_check
        %p466 = pneg %p465
      $region62: #{tpu_custom_call.1} parent=5 // pred_check_branch
        %468 = sbr.rel (%p466) target = $region64
      $region63: #{tpu_custom_call.1} parent=5 // pred_region
        %s469 = ssub.s32 %s20, 2
        // Predicated region
        $region65: #{tpu_custom_call.1} parent=63 // pred_check
          %p470 = pneg %p171
        $region66: #{tpu_custom_call.1} parent=63 // pred_check_branch
          %472 = sbr.rel (%p470) target = $region68
        $region67: #{tpu_custom_call.1} parent=63 // pred_region
          %s473 = sand.u32 %s156, 1
          %s474 = scalar_lea.sflag [#allocation4], %s473
          %s475 = sand.u32 %s156, 1
          %s476 = smul.addr %s475, 8
          %s477 = scalar_lea.vmem [#allocation9], %s476
          %479 = dma.done %s474, 128
        $region68: #{tpu_custom_call.1} parent=63 // pred_fallthru
          _
        // Predicated region
        $region69: #{tpu_custom_call.1} parent=63 // pred_check
          %p480 = pneg %p199
        $region70: #{tpu_custom_call.1} parent=63 // pred_check_branch
          %482 = sbr.rel (%p480) target = $region72
        $region71: #{tpu_custom_call.1} parent=63 // pred_region
          %s483 = sand.u32 %s184, 1
          %s484 = scalar_lea.sflag [#allocation11], %s483
          %s485 = sand.u32 %s184, 1
          %s486 = smul.addr %s485, 8
          %s487 = scalar_lea.vmem [#allocation10], %s486
          %489 = dma.done %s484, 128
        $region72: #{tpu_custom_call.1} parent=63 // pred_fallthru
          _
      $region64: #{tpu_custom_call.1} parent=5 // pred_fallthru
        _
    $region6: #{tpu_custom_call.1} parent=1 // loop_footer
      %s24 = sadd.s32 1, %s20
    $region7: #{tpu_custom_call.1} parent=1 // loop_footer_branch
      %19 = sbr.rel target = $region3
    $region8: #{tpu_custom_call.1} parent=1 // loop_exit
      _
    %490 = vsyncpa [#allocation3], 1
    %s491 = scalar_lea.sflag [#allocation3], 1
    %492 = vsyncpa %s491, 1
    %493 = vsyncpa [#allocation6], 1
    %494 = vsyncpa [#allocation4], 1
    %s495 = scalar_lea.sflag [#allocation4], 1
    %496 = vsyncpa %s495, 1
    %497 = vsyncpa [#allocation11], 1
    %s498 = scalar_lea.sflag [#allocation11], 1
    %499 = vsyncpa %s498, 1

</llo_original>
